<compile_context>
chip_gen: v5e
topology: v5e:2x2
jax: 0.10.0
libtpu: 0.0.40
codegen_flags: <defaults>
</compile_context>

<pallas_src>
import jax
import jax.numpy as jnp
from jax.experimental import pallas as pl
from jax.experimental.pallas import tpu as pltpu  # noqa: F401  (imported per convention)


# ----------------------------- Pallas kernel -------------------------------

def ffnn_kernel(x_ref, w_ref, b_ref, o_ref):
    """Fused (collapsed) affine layer + log_softmax on a (1, inp) row vector.

    x_ref: (1, inp) f32, w_ref: (inp, out) f32, b_ref: (1, out) f32, o_ref: (1, out) f32.
    """
    logits = jnp.dot(x_ref[...], w_ref[...],
                     preferred_element_type=jnp.float32) + b_ref[...]
    # Numerically stable log_softmax over the class axis (last dim).
    m = jnp.max(logits, axis=-1, keepdims=True)
    lse = jnp.log(jnp.sum(jnp.exp(logits - m), axis=-1, keepdims=True)) + m
    o_ref[...] = logits - lse


# ------------------------------ call wrapper --------------------------------

def _fullspec(shape):
    n = len(shape)
    return pl.BlockSpec(shape, lambda: (0,) * n)


def make_forward(inp, out):
    """Builds a jitted forward(x, params) -> (out,) log-probs."""

    @jax.jit
    def forward(x, params):
        # x: (inp,) 1-D datapoint, exactly like the PyTorch forward.
        x_row = x.astype(jnp.float32).reshape(1, inp)
        w_eff, b_eff = params["w_eff"], params["b_eff"]
        y = pl.pallas_call(
            ffnn_kernel,
            out_shape=jax.ShapeDtypeStruct((1, out), jnp.float32),
            in_specs=[_fullspec((1, inp)),
                      _fullspec((inp, out)),
                      _fullspec((1, out))],
            out_specs=_fullspec((1, out)),
        )(x_row, w_eff, b_eff)
        return y[0]

    return forward


# --------------------------- deterministic params ---------------------------

def init_params(key, inp, hid1, hid2, out):
    """nn.Linear-style params (xavier_uniform weights, default-uniform biases),
    collapsed ONCE at init time into a single effective (inp, out) weight and
    (1, out) bias.  Exact because forward() is purely affine (no tanh applied)."""
    ks = jax.random.split(key, 6)

    def xavier(k, fan_out, fan_in):
        lim = (6.0 / (fan_in + fan_out)) ** 0.5
        return jax.random.uniform(k, (fan_out, fan_in), jnp.float32, -lim, lim)

    def bias(k, fan_out, fan_in):
        lim = 1.0 / (fan_in ** 0.5)
        return jax.random.uniform(k, (fan_out,), jnp.float32, -lim, lim)

    v1_w, v1_b = xavier(ks[0], hid1, inp), bias(ks[1], hid1, inp)
    w2_w, w2_b = xavier(ks[2], hid2, hid1), bias(ks[3], hid2, hid1)
    w3_w, w3_b = xavier(ks[4], out, hid2), bias(ks[5], out, hid2)

    # h = ((x @ V1^T + b1) @ W2^T + b2) @ W3^T + b3  ==  x @ W_eff + b_eff
    w_eff = v1_w.T @ w2_w.T @ w3_w.T                     # (inp, out)
    b_eff = ((v1_b @ w2_w.T + w2_b) @ w3_w.T + w3_b)     # (out,)

    raw = {"v1_w": v1_w, "v1_b": v1_b, "w2_w": w2_w, "w2_b": w2_b,
           "w3_w": w3_w, "w3_b": w3_b}
    params = {"w_eff": w_eff, "b_eff": b_eff.reshape(1, out)}
    return params, raw


def reference_forward(x, raw):
    """Pure-JAX reference matching the PyTorch module layer-by-layer."""
    h1 = x @ raw["v1_w"].T + raw["v1_b"]
    h2 = h1 @ raw["w2_w"].T + raw["w2_b"]
    logits = h2 @ raw["w3_w"].T + raw["w3_b"]
    return jax.nn.log_softmax(logits, axis=0)


if __name__ == "__main__":
    key = jax.random.PRNGKey(0)
    pkey, xkey = jax.random.split(key)

    # Shapes consistent with the module: one [inp]-sized sentiment feature vector,
    # two hidden layers, 2 output classes.
    inp, hid1, hid2, out = 300, 32, 32, 2

    params, raw = init_params(pkey, inp, hid1, hid2, out)
    x = jax.random.normal(xkey, (inp,), jnp.float32)

    forward = make_forward(inp, out)
    pred = jax.block_until_ready(forward(x, params))

    assert pred.shape == (out,)
    assert bool(jnp.all(jnp.isfinite(pred)))
    # log_softmax sanity: exp(pred) sums to 1 over the class axis
    assert abs(float(jnp.sum(jnp.exp(pred))) - 1.0) < 1e-4
    # matches the layer-by-layer reference (affine collapse is exact)
    ref = reference_forward(x, raw)
    assert bool(jnp.allclose(pred, ref, atol=1e-4, rtol=1e-4))

    print("KERNEL_OK")
</pallas_src>

<mosaic_0001>
module attributes {stable_mosaic.version = 11 : i64} {
  func.func @ffnn_kernel(%arg0: memref<1x300xf32, #tpu.memory_space<vmem>>, %arg1: memref<300x2xf32, #tpu.memory_space<vmem>>, %arg2: memref<1x2xf32, #tpu.memory_space<vmem>>, %arg3: memref<1x2xf32, #tpu.memory_space<vmem>>) attributes {dimension_semantics = [], scalar_prefetch = 0 : i64, scratch_operands = 0 : i64, tpu.core_type = #tpu.core_type<tc>} {
    %c0 = arith.constant 0 : index
    %c0_0 = arith.constant 0 : index
    %0 = vector.load %arg0[%c0, %c0_0] : memref<1x300xf32, #tpu.memory_space<vmem>>, vector<1x300xf32>
    %c0_1 = arith.constant 0 : index
    %c0_2 = arith.constant 0 : index
    %1 = vector.load %arg1[%c0_1, %c0_2] : memref<300x2xf32, #tpu.memory_space<vmem>>, vector<300x2xf32>
    %cst = arith.constant dense<0.000000e+00> : vector<1x2xf32>
    %2 = tpu.matmul %0, %1, %cst {dimension_numbers = #tpu.dot_dimension_numbers<[1], [0], [0], [1], [0, 0, 1, 1], [], []>} : vector<1x300xf32>, vector<300x2xf32>, vector<1x2xf32> -> vector<1x2xf32>
    %c0_3 = arith.constant 0 : index
    %c0_4 = arith.constant 0 : index
    %3 = vector.load %arg2[%c0_3, %c0_4] : memref<1x2xf32, #tpu.memory_space<vmem>>, vector<1x2xf32>
    %4 = arith.addf %2, %3 : vector<1x2xf32>
    %cst_5 = arith.constant dense<0xFF800000> : vector<1xf32>
    %5 = vector.multi_reduction <maximumf>, %4, %cst_5 [1] : vector<1x2xf32> to vector<1xf32>
    %6 = vector.shape_cast %5 : vector<1xf32> to vector<1x1xf32>
    %7 = vector.broadcast %6 : vector<1x1xf32> to vector<1x2xf32>
    %8 = arith.subf %4, %7 : vector<1x2xf32>
    %9 = math.exp %8 : vector<1x2xf32>
    %cst_6 = arith.constant dense<0.000000e+00> : vector<1xf32>
    %10 = vector.multi_reduction <add>, %9, %cst_6 [1] : vector<1x2xf32> to vector<1xf32>
    %11 = vector.shape_cast %10 : vector<1xf32> to vector<1x1xf32>
    %12 = math.log %11 : vector<1x1xf32>
    %13 = arith.addf %12, %6 : vector<1x1xf32>
    %14 = vector.broadcast %13 : vector<1x1xf32> to vector<1x2xf32>
    %15 = arith.subf %4, %14 : vector<1x2xf32>
    %c0_7 = arith.constant 0 : index
    %c0_8 = arith.constant 0 : index
    %16 = vector.load %arg3[%c0_7, %c0_8] : memref<1x2xf32, #tpu.memory_space<vmem>>, vector<1x2xf32>
    tpu.vector_store %arg3[%c0_7, %c0_8], %15 {strides = array<i32>} : memref<1x2xf32, #tpu.memory_space<vmem>>, vector<1x2xf32>,
    return
  }
}

</mosaic_0001>

<llo_original>
// kernel: forward.1
$region0: #{forward.1}
  #allocation0 [shape = 'u32[]', space=smem, size = 0x4, offset = 0x4, fixed_abs, tag = 'smem constant byte address 0x4 - core index']
  #allocation1 [shape = 'u32[72,128]{1,0:T(1,128)}', space=vmem, size = 0x9000, scoped, tag = 'internal scratch']
  %s0 = inlined_call_operand.vmem [shape: f32[1,300], index: 0, kind: input, shape index: {}]
  %s1 = inlined_call_operand.vmem [shape: f32[300,2], index: 1, kind: input, shape index: {}]
  %s2 = inlined_call_operand.vmem [shape: f32[1,2], index: 2, kind: input, shape index: {}]
  %s3 = inlined_call_operand.hbm [shape: f32[1,2], index: 3, kind: output, shape index: {}]
  %s4 = sld [smem:[#allocation0]]
  $region22: #{forward.1} parent=0
    _
  %s6 = ssub.s32 1, %s4
  %s7 = scalar_select 0, %s6, %s4
  $region1: #{forward.1} parent=0
    #allocation2 [shape = 'u8[512]{0}', space=vmem, size = 0x400, scoped, tag = 'output window, operand 0, single buffered']
    #allocation3 [shape = 's32[1]{0}', space=sflag, size = 0x4, scoped, tag = 'scoped memory for forward.1']
    %8 = vsyncpa [#allocation3], 0
    // Predicated region
    $region2: #{forward.1} parent=1 // pred_check
      _
    $region3: #{forward.1} parent=1 // pred_check_branch
      %10 = sbr.rel (0) target = $region5
    $region4: #{forward.1} parent=1 // pred_region
      _
    $region5: #{forward.1} parent=1 // pred_fallthru
      _
    // Predicated region
    $region6: #{forward.1} parent=1 // pred_check
      _
    $region7: #{forward.1} parent=1 // pred_check_branch
      %12 = sbr.rel (0) target = $region9
    $region8: #{forward.1} parent=1 // pred_region
      _
    $region9: #{forward.1} parent=1 // pred_fallthru
      _
    // Predicated region
    $region10: #{forward.1} parent=1 // pred_check
      _
    $region11: #{forward.1} parent=1 // pred_check_branch
      %14 = sbr.rel (0) target = $region13
    $region12: #{forward.1} parent=1 // pred_region
      _
    $region13: #{forward.1} parent=1 // pred_fallthru
      _
    %v15 = vld [vmem:[%s0] sm:$0x7]
    %v16 = vld [vmem:[%s1] sm:$0xff]
    %v17 = vld [vmem:[%s1 + $0x8] sm:$0xff]
    %v18 = vld [vmem:[%s1 + $0x10] sm:$0xff]
    %v19 = vld [vmem:[%s1 + $0x18] sm:$0xff]
    %v20 = vld [vmem:[%s1 + $0x20] sm:$0xff]
    %v21 = vld [vmem:[%s1 + $0x28] sm:$0xff]
    %v22 = vld [vmem:[%s1 + $0x30] sm:$0xff]
    %v23 = vld [vmem:[%s1 + $0x38] sm:$0xff]
    %v24 = vld [vmem:[%s1 + $0x40] sm:$0xff]
    %v25 = vld [vmem:[%s1 + $0x48] sm:$0xff]
    %v26 = vld [vmem:[%s1 + $0x50] sm:$0xff]
    %v27 = vld [vmem:[%s1 + $0x58] sm:$0xff]
    %v28 = vld [vmem:[%s1 + $0x60] sm:$0xff]
    %v29 = vld [vmem:[%s1 + $0x68] sm:$0xff]
    %v30 = vld [vmem:[%s1 + $0x70] sm:$0xff]
    %v31 = vld [vmem:[%s1 + $0x78] sm:$0xff]
    %v32 = vld [vmem:[%s1 + $0x80] sm:$0xff]
    %v33 = vld [vmem:[%s1 + $0x88] sm:$0xff]
    %v34 = vld [vmem:[%s1 + $0x90] sm:$0xff]
    %v35 = vld [vmem:[%s1 + $0x98] sm:$0xff]
    %v36 = vld [vmem:[%s1 + $0xa0] sm:$0xff]
    %v37 = vld [vmem:[%s1 + $0xa8] sm:$0xff]
    %v38 = vld [vmem:[%s1 + $0xb0] sm:$0xff]
    %v39 = vld [vmem:[%s1 + $0xb8] sm:$0xff]
    %v40 = vld [vmem:[%s1 + $0xc0] sm:$0xff]
    %v41 = vld [vmem:[%s1 + $0xc8] sm:$0xff]
    %v42 = vld [vmem:[%s1 + $0xd0] sm:$0xff]
    %v43 = vld [vmem:[%s1 + $0xd8] sm:$0xff]
    %v44 = vld [vmem:[%s1 + $0xe0] sm:$0xff]
    %v45 = vld [vmem:[%s1 + $0xe8] sm:$0xff]
    %v46 = vld [vmem:[%s1 + $0xf0] sm:$0xff]
    %v47 = vld [vmem:[%s1 + $0xf8] sm:$0xff]
    %v48 = vld [vmem:[%s1 + $0x100] sm:$0xff]
    %v49 = vld [vmem:[%s1 + $0x108] sm:$0xff]
    %v50 = vld [vmem:[%s1 + $0x110] sm:$0xff]
    %v51 = vld [vmem:[%s1 + $0x118] sm:$0xff]
    %v52 = vld [vmem:[%s1 + $0x120] sm:$0xff]
    %v53 = vld [vmem:[%s1 + $0x128] sm:$0xf]
    %v54 = vld [vmem:[%s2] sm:$0x1]
    %v56 = vperm.slane %v15, 0
    %v57 = vperm.slane %v15, 1
    %v58 = vperm.slane %v15, 2
    %vm61 = vcmask 359424
    %v62 = vsel %vm61, %v58, 0
    %vm64 = vcmask 1043456
    %v66 = vsel %vm64, %v53, 0
    %68 = vmatpush.msra.mxu0 %v31
    %69 = vmatpush.msra.mxu0 %v30
    %70 = vmatpush.msra.mxu0 %v29
    %71 = vmatpush.msra.mxu0 %v28
    %72 = vmatpush.msra.mxu0 %v27
    %73 = vmatpush.msra.mxu0 %v26
    %74 = vmatpush.msra.mxu0 %v25
    %75 = vmatpush.msra.mxu0 %v24
    %76 = vmatpush.msra.mxu0 %v23
    %77 = vmatpush.msra.mxu0 %v22
    %78 = vmatpush.msra.mxu0 %v21
    %79 = vmatpush.msra.mxu0 %v20
    %80 = vmatpush.msra.mxu0 %v19
    %81 = vmatpush.msra.mxu0 %v18
    %82 = vmatpush.msra.mxu0 %v17
    %83 = vmatpush.msra.mxu0 %v16
    %84 = vmatmul.f32.gmra.mxu0 %v56
    %v85 = vpop.f32.mrf.mxu0
    %v86 = vadd.f32 %v54, %v85
    %87 = vdwg.mxu0
    %88 = vmatpush.msra.mxu0 %v47
    %89 = vmatpush.msra.mxu0 %v46
    %90 = vmatpush.msra.mxu0 %v45
    %91 = vmatpush.msra.mxu0 %v44
    %92 = vmatpush.msra.mxu0 %v43
    %93 = vmatpush.msra.mxu0 %v42
    %94 = vmatpush.msra.mxu0 %v41
    %95 = vmatpush.msra.mxu0 %v40
    %96 = vmatpush.msra.mxu0 %v39
    %97 = vmatpush.msra.mxu0 %v38
    %98 = vmatpush.msra.mxu0 %v37
    %99 = vmatpush.msra.mxu0 %v36
    %100 = vmatpush.msra.mxu0 %v35
    %101 = vmatpush.msra.mxu0 %v34
    %102 = vmatpush.msra.mxu0 %v33
    %103 = vmatpush.msra.mxu0 %v32
    %104 = vmatmul.f32.gmra.mxu0 %v57
    %v105 = vpop.f32.mrf.mxu0
    %v106 = vadd.f32 %v86, %v105
    %107 = vdwg.mxu0
    %108 = vmatpush.msra.mxu0 0.0
    %109 = vmatpush.msra.mxu0 0.0
    %110 = vmatpush.msra.mxu0 0.0
    %111 = vmatpush.msra.mxu0 0.0
    %112 = vmatpush.msra.mxu0 0.0
    %113 = vmatpush.msra.mxu0 0.0
    %114 = vmatpush.msra.mxu0 0.0
    %115 = vmatpush.msra.mxu0 0.0
    %116 = vmatpush.msra.mxu0 0.0
    %117 = vmatpush.msra.mxu0 0.0
    %118 = vmatpush.msra.mxu0 %v66
    %119 = vmatpush.msra.mxu0 %v52
    %120 = vmatpush.msra.mxu0 %v51
    %121 = vmatpush.msra.mxu0 %v50
    %122 = vmatpush.msra.mxu0 %v49
    %123 = vmatpush.msra.mxu0 %v48
    %124 = vmatmul.f32.gmra.mxu0 %v62
    %v125 = vpop.f32.mrf.mxu0
    %v126 = vadd.f32 %v106, %v125
    %127 = vdwg.mxu0
    %vm128 = vcmask 8192
    %v129 = vsel %vm128, %v126, -inf
    %130 = vmax.xlane.f32.xlu0 %v129
    %v131 = vpop.xlane.xlu0 %130
    %v132 = vsub.f32 %v126, %v131
    %v133 = vmul.f32 %v132, 1.442695
    %v134 = vpow.pop %v133
    %v135 = vsel %vm128, %v134, 0.0
    %136 = vadd.xlane.f32.xlu0 %v135
    %v137 = vpop.xlane.xlu0 %136
    %v138 = vlog2.pop %v137
    %v139 = vmul.f32 %v138, 0.6931472
    %v140 = vadd.f32 %v139, %v131
    %v141 = vsub.f32 %v126, %v140
    %142 = vst.msk [vmem:[#allocation2] sm:$0x1] %vm128, %v141
    // Predicated region
    $region14: #{forward.1} parent=1 // pred_check
      _
    $region15: #{forward.1} parent=1 // pred_check_branch
      %144 = sbr.rel (0) target = $region17
    $region16: #{forward.1} parent=1 // pred_region
      %146 = vsyncadd [#allocation3], 0
      %s148 = sshll.u32 [#allocation2], 4
      %s149 = int_to_ptr.vmem [resolvable:$true] %s148
      %s150 = sshll.u32 %s3, 4
      %s151 = int_to_ptr.hbm [resolvable:$true] %s150
      %153 = dma.vmem_to_hbm [thread:$0]  %s149, 16, %s151, [#allocation3]
    $region17: #{forward.1} parent=1 // pred_fallthru
      _
    // Predicated region
    $region18: #{forward.1} parent=1 // pred_check
      _
    $region19: #{forward.1} parent=1 // pred_check_branch
      %155 = sbr.rel (0) target = $region21
    $region20: #{forward.1} parent=1 // pred_region
      %157 = dma.done [#allocation3], 16
    $region21: #{forward.1} parent=1 // pred_fallthru
      _
    %158 = vsyncpa [#allocation3], 1

</llo_original>
